<compile_context>
chip_gen: v5e
topology: v5e:2x2
jax: 0.10.0
libtpu: 0.0.40
codegen_flags: <defaults>
</compile_context>

<pallas_src>
import functools
import math

import jax
import jax.numpy as jnp
from jax import lax
from jax.experimental import pallas as pl
from jax.experimental.pallas import tpu as pltpu


def _cosine_linear_kernel(wscale_ref, x_ref, w_ref, o_ref, acc_ref, ssq_ref, *,
                          mxu_dtype):
    # wscale_ref: VMEM (1, TN)  f32   sigma / max(||W_row||, 1e-12)  (precomputed)
    # x_ref:      VMEM (TM, TK) f32   raw input tile
    # w_ref:      VMEM (TN, TK) f32   raw weight tile (not normalized)
    # o_ref:      VMEM (TM, TN)       output tile
    # acc_ref:    VMEM (TM, TN) f32   matmul accumulator (scratch)
    # ssq_ref:    VMEM (TM, 1)  f32   running sum(x*x) per row (scratch)
    k = pl.program_id(2)

    @pl.when(k == 0)
    def _():
        acc_ref[...] = jnp.zeros_like(acc_ref)
        ssq_ref[...] = jnp.zeros_like(ssq_ref)

    x = x_ref[...]

    # Partial row sum-of-squares for the x inverse norm (f32, VALU + XLU).
    ssq_ref[...] += jnp.sum(x * x, axis=1, keepdims=True)

    # MXU matmul on (possibly) bf16 operands with f32 accumulation.  Contraction
    # is dim 1 of both operands, so the weight tile is never transposed.
    acc_ref[...] += lax.dot_general(
        x.astype(mxu_dtype),
        w_ref[...].astype(mxu_dtype),
        dimension_numbers=(((1,), (1,)), ((), ())),
        preferred_element_type=jnp.float32,
    )

    @pl.when(k == pl.num_programs(2) - 1)
    def _():
        # rsqrt(max(ss, eps^2)) == 1 / max(sqrt(ss), 1e-12)   (EUP slot).
        x_inv = lax.rsqrt(jnp.maximum(ssq_ref[...], jnp.float32(1e-24)))  # (TM,1)
        o_ref[...] = (acc_ref[...] * x_inv * wscale_ref[...]).astype(o_ref.dtype)


def cosine_linear(x, weight, sigma=None, *, tm=256, tn=256, tk=None,
                  mxu_dtype=jnp.bfloat16):
    """x: (B, D), weight: (O, D), sigma: (1,) or None -> (B, O)."""
    B, D = x.shape
    O, D2 = weight.shape
    assert D == D2

    # Epilogue row scale: sigma / max(||W_row||, 1e-12), computed once (O*D work),
    # so the kernel neither normalizes W nor recomputes its norms per grid step.
    w32 = weight.astype(jnp.float32)
    w_scale = lax.rsqrt(jnp.maximum(jnp.sum(w32 * w32, axis=1), jnp.float32(1e-24)))
    if sigma is not None:
        w_scale = w_scale * sigma[0]
    w_scale = w_scale.reshape(1, O)

    # Tile sizes.  No wrapper-side padding: if a dim is small we take it whole
    # (block dim == full array dim is always legal); otherwise we keep the
    # aligned default tile and let Pallas handle the ragged final block.
    tm = B if B <= tm else tm          # tiled tm stays a multiple of 8
    tn = O if O <= tn else tn          # tiled tn stays a multiple of 128
    if tk is None:
        tk = D
        if D > 4096:                   # keep double-buffered tiles inside v7x's 64 MiB
            for cand in (4096, 2048, 1024, 512, 256, 128):
                if D % cand == 0:
                    tk = cand
                    break
    assert D % tk == 0, "contraction tile must divide in_features"

    n_m = pl.cdiv(B, tm)
    n_n = pl.cdiv(O, tn)
    n_k = D // tk

    # Adaptive grid-axis order (matters for the whole-D case, n_k == 1): the
    # outer-axis operand is streamed from HBM once; the inner-axis operand is
    # re-read n_outer times.  Pick the order that minimizes estimated reads.
    reads_w_outer = O * D + n_n * B * D      # weights outer -> x re-read n_n times
    reads_x_outer = B * D + n_m * O * D      # batch outer   -> W re-read n_m times
    weights_outer = reads_w_outer <= reads_x_outer

    if weights_outer:
        grid = (n_n, n_m, n_k)
        ws_map = lambda n, m, k: (0, n)
        x_map = lambda n, m, k: (m, k)
        w_map = lambda n, m, k: (n, k)
        o_map = lambda n, m, k: (m, n)
    else:
        grid = (n_m, n_n, n_k)
        ws_map = lambda m, n, k: (0, n)
        x_map = lambda m, n, k: (m, k)
        w_map = lambda m, n, k: (n, k)
        o_map = lambda m, n, k: (m, n)

    itemsize = 4
    vmem_est = (2 * itemsize * (tm * tk + tn * tk + tm * tn)      # dbl-buffered tiles
                + itemsize * (tm * tn + 8 * tm))                  # scratch
    vmem_limit = min(128 * 1024 * 1024, max(32 * 1024 * 1024, 2 * vmem_est))

    kernel = functools.partial(_cosine_linear_kernel, mxu_dtype=mxu_dtype)

    return pl.pallas_call(
        kernel,
        out_shape=jax.ShapeDtypeStruct((B, O), x.dtype),
        grid=grid,
        in_specs=[
            pl.BlockSpec((1, tn), ws_map),     # precomputed sigma/||W_row|| row scale
            pl.BlockSpec((tm, tk), x_map),     # raw x tile
            pl.BlockSpec((tn, tk), w_map),     # raw W tile
        ],
        out_specs=pl.BlockSpec((tm, tn), o_map),
        scratch_shapes=[
            pltpu.VMEM((tm, tn), jnp.float32),   # matmul accumulator
            pltpu.VMEM((tm, 1), jnp.float32),    # running sum(x*x)
        ],
        compiler_params=pltpu.CompilerParams(
            dimension_semantics=("parallel", "parallel", "arbitrary"),
            vmem_limit_bytes=int(vmem_limit),
        ),
        cost_estimate=pl.CostEstimate(
            flops=2 * B * O * D,
            transcendentals=B + O,
            bytes_accessed=itemsize * (B * D + O * D + B * O + O),
        ),
    )(w_scale, x, weight)


def reference(x, weight, sigma):
    eps = 1e-12
    xn = x / jnp.maximum(jnp.linalg.norm(x, axis=1, keepdims=True), eps)
    wn = weight / jnp.maximum(jnp.linalg.norm(weight, axis=1, keepdims=True), eps)
    out = xn @ wn.T
    return sigma[0] * out if sigma is not None else out


if __name__ == "__main__":
    key = jax.random.PRNGKey(0)
    k_x, k_w, k_x2, k_w2, k_x3, k_w3 = jax.random.split(key, 6)
    sigma = jnp.ones((1,), jnp.float32)

    # ---- case 1: module-style small shapes ---------------------------------
    batch, in_features, out_features = 8, 32, 16
    stdv = 1.0 / math.sqrt(in_features)   # CosineLinear.reset_parameters
    weight = jax.random.uniform(k_w, (out_features, in_features), jnp.float32,
                                minval=-stdv, maxval=stdv)
    x = jax.random.normal(k_x, (batch, in_features), jnp.float32)
    ref = reference(x, weight, sigma)

    # exact f32-MXU path
    out_f32 = jax.block_until_ready(cosine_linear(x, weight, sigma,
                                                  mxu_dtype=jnp.float32))
    assert out_f32.shape == (batch, out_features)
    assert jnp.allclose(out_f32, ref, atol=1e-5, rtol=1e-5), \
        float(jnp.max(jnp.abs(out_f32 - ref)))

    # default bf16-MXU path (f32 norms + f32 accumulation): looser tolerance
    out_bf = jax.block_until_ready(cosine_linear(x, weight, sigma))
    assert jnp.allclose(out_bf, ref, atol=2e-2, rtol=2e-2), \
        float(jnp.max(jnp.abs(out_bf - ref)))

    # ---- case 2: exercises the K-split accumulator path (tk < D) -----------
    b2, d2, o2 = 12, 256, 40
    w2 = jax.random.uniform(k_w2, (o2, d2), jnp.float32,
                            minval=-1.0 / math.sqrt(d2), maxval=1.0 / math.sqrt(d2))
    x2 = jax.random.normal(k_x2, (b2, d2), jnp.float32)
    out2 = jax.block_until_ready(cosine_linear(x2, w2, sigma, tk=128))
    assert jnp.allclose(out2, reference(x2, w2, sigma), atol=2e-2, rtol=2e-2)

    # ---- case 3: exercises ragged (non-divisible) batch tiles, no padding ---
    b3, d3, o3 = 70, 32, 16
    w3 = jax.random.uniform(k_w3, (o3, d3), jnp.float32,
                            minval=-1.0 / math.sqrt(d3), maxval=1.0 / math.sqrt(d3))
    x3 = jax.random.normal(k_x3, (b3, d3), jnp.float32)
    out3 = jax.block_until_ready(cosine_linear(x3, w3, sigma, tm=32))
    assert out3.shape == (b3, o3)
    assert jnp.allclose(out3, reference(x3, w3, sigma), atol=2e-2, rtol=2e-2)

    print("KERNEL_OK")
</pallas_src>

<mosaic_0001>
module attributes {stable_mosaic.version = 11 : i64} {
  func.func @_cosine_linear_kernel(%arg0: i32, %arg1: i32, %arg2: i32, %arg3: memref<1x16xf32, #tpu.memory_space<vmem>>, %arg4: memref<8x32xf32, #tpu.memory_space<vmem>>, %arg5: memref<16x32xf32, #tpu.memory_space<vmem>>, %arg6: memref<8x16xf32, #tpu.memory_space<vmem>>, %arg7: memref<8x16xf32, #tpu.memory_space<vmem>>, %arg8: memref<8x1xf32, #tpu.memory_space<vmem>>) attributes {dimension_semantics = [#tpu.dimension_semantics<parallel>, #tpu.dimension_semantics<parallel>, #tpu.dimension_semantics<arbitrary>], iteration_bounds = array<i64: 1, 1, 1>, scalar_prefetch = 0 : i64, scratch_operands = 2 : i64, tpu.core_type = #tpu.core_type<tc>, window_params = [{transform_indices = @transform_0, window_bounds = array<i64: 1, 16>}, {transform_indices = @transform_1, window_bounds = array<i64: 8, 32>}, {transform_indices = @transform_2, window_bounds = array<i64: 16, 32>}, {transform_indices = @transform_3, window_bounds = array<i64: 8, 16>}]} {
    %c0_i32 = arith.constant 0 : i32
    %0 = arith.cmpi eq, %arg2, %c0_i32 : i32
    %1 = arith.extui %0 : i1 to i32
    %c0_i32_0 = arith.constant 0 : i32
    %2 = arith.cmpi ne, %1, %c0_i32_0 : i32
    scf.if %2 {
      %cst_15 = arith.constant 0.000000e+00 : f32
      %18 = vector.broadcast %cst_15 : f32 to vector<8x16xf32>
      %c0_16 = arith.constant 0 : index
      %c0_17 = arith.constant 0 : index
      %19 = vector.load %arg7[%c0_16, %c0_17] : memref<8x16xf32, #tpu.memory_space<vmem>>, vector<8x16xf32>
      tpu.vector_store %arg7[%c0_16, %c0_17], %18 {strides = array<i32>} : memref<8x16xf32, #tpu.memory_space<vmem>>, vector<8x16xf32>,
      %cst_18 = arith.constant 0.000000e+00 : f32
      %20 = vector.broadcast %cst_18 : f32 to vector<8x1xf32>
      %c0_19 = arith.constant 0 : index
      %c0_20 = arith.constant 0 : index
      %21 = vector.load %arg8[%c0_19, %c0_20] : memref<8x1xf32, #tpu.memory_space<vmem>>, vector<8x1xf32>
      tpu.vector_store %arg8[%c0_19, %c0_20], %20 {strides = array<i32>} : memref<8x1xf32, #tpu.memory_space<vmem>>, vector<8x1xf32>,
    } else {
    }
    %c0 = arith.constant 0 : index
    %c0_1 = arith.constant 0 : index
    %3 = vector.load %arg4[%c0, %c0_1] : memref<8x32xf32, #tpu.memory_space<vmem>>, vector<8x32xf32>
    %c0_2 = arith.constant 0 : index
    %c0_3 = arith.constant 0 : index
    %4 = vector.load %arg8[%c0_2, %c0_3] : memref<8x1xf32, #tpu.memory_space<vmem>>, vector<8x1xf32>
    %5 = arith.mulf %3, %3 : vector<8x32xf32>
    %cst = arith.constant dense<0.000000e+00> : vector<8xf32>
    %6 = vector.multi_reduction <add>, %5, %cst [1] : vector<8x32xf32> to vector<8xf32>
    %7 = vector.shape_cast %6 : vector<8xf32> to vector<8x1xf32>
    %8 = arith.addf %4, %7 : vector<8x1xf32>
    %c0_4 = arith.constant 0 : index
    %c0_5 = arith.constant 0 : index
    %9 = vector.load %arg8[%c0_4, %c0_5] : memref<8x1xf32, #tpu.memory_space<vmem>>, vector<8x1xf32>
    tpu.vector_store %arg8[%c0_4, %c0_5], %8 {strides = array<i32>} : memref<8x1xf32, #tpu.memory_space<vmem>>, vector<8x1xf32>,
    %c0_6 = arith.constant 0 : index
    %c0_7 = arith.constant 0 : index
    %10 = vector.load %arg7[%c0_6, %c0_7] : memref<8x16xf32, #tpu.memory_space<vmem>>, vector<8x16xf32>
    %c0_8 = arith.constant 0 : index
    %c0_9 = arith.constant 0 : index
    %11 = vector.load %arg5[%c0_8, %c0_9] : memref<16x32xf32, #tpu.memory_space<vmem>>, vector<16x32xf32>
    %cst_10 = arith.constant dense<0.000000e+00> : vector<8x16xf32>
    %12 = tpu.matmul %3, %11, %cst_10 {dimension_numbers = #tpu.dot_dimension_numbers<[1], [1], [0], [0], [0, 0, 1, 0], [], []>} : vector<8x32xf32>, vector<16x32xf32>, vector<8x16xf32> -> vector<8x16xf32>
    %13 = arith.addf %10, %12 : vector<8x16xf32>
    %c0_11 = arith.constant 0 : index
    %c0_12 = arith.constant 0 : index
    %14 = vector.load %arg7[%c0_11, %c0_12] : memref<8x16xf32, #tpu.memory_space<vmem>>, vector<8x16xf32>
    tpu.vector_store %arg7[%c0_11, %c0_12], %13 {strides = array<i32>} : memref<8x16xf32, #tpu.memory_space<vmem>>, vector<8x16xf32>,
    %c0_i32_13 = arith.constant 0 : i32
    %15 = arith.cmpi eq, %arg2, %c0_i32_13 : i32
    %16 = arith.extui %15 : i1 to i32
    %c0_i32_14 = arith.constant 0 : i32
    %17 = arith.cmpi ne, %16, %c0_i32_14 : i32
    scf.if %17 {
      %c0_15 = arith.constant 0 : index
      %c0_16 = arith.constant 0 : index
      %18 = vector.load %arg8[%c0_15, %c0_16] : memref<8x1xf32, #tpu.memory_space<vmem>>, vector<8x1xf32>
      %cst_17 = arith.constant 1.000000e-24 : f32
      %19 = vector.broadcast %cst_17 : f32 to vector<8x1xf32>
      %20 = arith.maximumf %18, %19 : vector<8x1xf32>
      %21 = math.rsqrt %20 : vector<8x1xf32>
      %c0_18 = arith.constant 0 : index
      %c0_19 = arith.constant 0 : index
      %22 = vector.load %arg7[%c0_18, %c0_19] : memref<8x16xf32, #tpu.memory_space<vmem>>, vector<8x16xf32>
      %23 = vector.broadcast %21 : vector<8x1xf32> to vector<8x16xf32>
      %24 = arith.mulf %22, %23 : vector<8x16xf32>
      %c0_20 = arith.constant 0 : index
      %c0_21 = arith.constant 0 : index
      %25 = vector.load %arg3[%c0_20, %c0_21] : memref<1x16xf32, #tpu.memory_space<vmem>>, vector<1x16xf32>
      %26 = vector.broadcast %25 : vector<1x16xf32> to vector<8x16xf32>
      %27 = arith.mulf %24, %26 : vector<8x16xf32>
      %c0_22 = arith.constant 0 : index
      %c0_23 = arith.constant 0 : index
      %28 = vector.load %arg6[%c0_22, %c0_23] : memref<8x16xf32, #tpu.memory_space<vmem>>, vector<8x16xf32>
      tpu.vector_store %arg6[%c0_22, %c0_23], %27 {strides = array<i32>} : memref<8x16xf32, #tpu.memory_space<vmem>>, vector<8x16xf32>,
    } else {
    }
    return
  }
  func.func @transform_0(%arg0: i32, %arg1: i32, %arg2: i32) -> (i32, i32) {
    %c0_i32 = arith.constant 0 : i32
    %c0_i32_0 = arith.constant 0 : i32
    return %c0_i32, %arg0 : i32, i32
  }
  func.func @transform_1(%arg0: i32, %arg1: i32, %arg2: i32) -> (i32, i32) {
    %c0_i32 = arith.constant 0 : i32
    return %arg1, %arg2 : i32, i32
  }
  func.func @transform_2(%arg0: i32, %arg1: i32, %arg2: i32) -> (i32, i32) {
    %c0_i32 = arith.constant 0 : i32
    return %arg0, %arg2 : i32, i32
  }
  func.func @transform_3(%arg0: i32, %arg1: i32, %arg2: i32) -> (i32, i32) {
    %c0_i32 = arith.constant 0 : i32
    return %arg1, %arg0 : i32, i32
  }
}

</mosaic_0001>

<llo_original>
// kernel: tpu_custom_call.1
$region0: #{tpu_custom_call.1}
  #allocation0 [shape = 'u32[]', space=smem, size = 0x4, offset = 0x4, fixed_abs, tag = 'smem constant byte address 0x4 - core index']
  #allocation1 [shape = 'u32[72,128]{1,0:T(1,128)}', space=vmem, size = 0x9000, scoped, tag = 'internal scratch']
  #allocation2 [shape = 'f32[8,16]{1,0:T(8,128)}', space=vmem, size = 0x1000, scoped, tag = 'scratch operand']
  #allocation3 [shape = 'f32[8,1]{1,0:T(8,128)}', space=vmem, size = 0x1000, scoped, tag = 'scratch operand']
  %s0 = inlined_call_operand.hbm [shape: f32[1,16], index: 0, kind: input, shape index: {}]
  %s1 = inlined_call_operand.hbm [shape: f32[8,32], index: 1, kind: input, shape index: {}]
  %s2 = inlined_call_operand.hbm [shape: f32[16,32], index: 2, kind: input, shape index: {}]
  %s3 = inlined_call_operand.hbm [shape: f32[8,16], index: 3, kind: output, shape index: {}]
  %s4 = sld [smem:[#allocation0]]
  $region42: #{tpu_custom_call.1} parent=0
    _
  %s6 = ssub.s32 1, %s4
  %s7 = scalar_select 0, %s6, %s4
  $region1: #{tpu_custom_call.1} parent=0
    #allocation4 [shape = 'u8[512]{0}', space=vmem, size = 0x400, scoped, tag = 'input window, operand 0, single buffered']
    #allocation5 [shape = 's32[1]{0}', space=sflag, size = 0x4, scoped, tag = 'scoped memory for tpu_custom_call.1']
    #allocation6 [shape = 's32[1]{0}', space=sflag, size = 0x4, scoped, tag = 'scoped memory for tpu_custom_call.1']
    #allocation7 [shape = 'u8[4096]{0}', space=vmem, size = 0x1000, scoped, tag = 'input window, operand 1, single buffered']
    #allocation8 [shape = 's32[1]{0}', space=sflag, size = 0x4, scoped, tag = 'scoped memory for tpu_custom_call.1']
    #allocation9 [shape = 'u8[8192]{0}', space=vmem, size = 0x2000, scoped, tag = 'input window, operand 2, single buffered']
    #allocation10 [shape = 'u8[4096]{0}', space=vmem, size = 0x1000, scoped, tag = 'output window, operand 0, single buffered']
    %8 = vsyncpa [#allocation5], 0
    %9 = vsyncpa [#allocation8], 0
    %10 = vsyncpa [#allocation6], 0
    // Predicated region
    $region2: #{tpu_custom_call.1} parent=1 // pred_check
      _
    $region3: #{tpu_custom_call.1} parent=1 // pred_check_branch
      %12 = sbr.rel (0) target = $region5
    $region4: #{tpu_custom_call.1} parent=1 // pred_region
      %14 = vsyncadd [#allocation5], 0
      %s16 = sshll.u32 %s0, 4
      %s17 = int_to_ptr.hbm [resolvable:$true] %s16
      %s18 = sshll.u32 [#allocation4], 4
      %s19 = int_to_ptr.vmem [resolvable:$true] %s18
      %21 = dma.hbm_to_vmem [thread:$0]  %s17, 16, %s19, [#allocation5]
    $region5: #{tpu_custom_call.1} parent=1 // pred_fallthru
      _
    // Predicated region
    $region6: #{tpu_custom_call.1} parent=1 // pred_check
      _
    $region7: #{tpu_custom_call.1} parent=1 // pred_check_branch
      %23 = sbr.rel (0) target = $region9
    $region8: #{tpu_custom_call.1} parent=1 // pred_region
      %25 = vsyncadd [#allocation8], 0
      %s27 = sshll.u32 %s1, 4
      %s28 = int_to_ptr.hbm [resolvable:$true] %s27
      %s29 = sshll.u32 [#allocation7], 4
      %s30 = int_to_ptr.vmem [resolvable:$true] %s29
      %32 = dma.hbm_to_vmem [thread:$0]  %s28, 128, %s30, [#allocation8]
    $region9: #{tpu_custom_call.1} parent=1 // pred_fallthru
      _
    // Predicated region
    $region10: #{tpu_custom_call.1} parent=1 // pred_check
      _
    $region11: #{tpu_custom_call.1} parent=1 // pred_check_branch
      %34 = sbr.rel (0) target = $region13
    $region12: #{tpu_custom_call.1} parent=1 // pred_region
      %36 = vsyncadd [#allocation8], 0
      %s37 = sshll.u32 %s2, 4
      %s38 = int_to_ptr.hbm [resolvable:$true] %s37
      %s39 = sshll.u32 [#allocation9], 4
      %s40 = int_to_ptr.vmem [resolvable:$true] %s39
      %45 = dma.hbm_to_vmem [thread:$0]  %s38, 256, %s40, [#allocation8], 128, 128, 8
    $region13: #{tpu_custom_call.1} parent=1 // pred_fallthru
      _
    // Predicated region
    $region14: #{tpu_custom_call.1} parent=1 // pred_check
      _
    $region15: #{tpu_custom_call.1} parent=1 // pred_check_branch
      %47 = sbr.rel (0) target = $region17
    $region16: #{tpu_custom_call.1} parent=1 // pred_region
      %49 = dma.done [#allocation5], 16
    $region17: #{tpu_custom_call.1} parent=1 // pred_fallthru
      _
    // Predicated region
    $region18: #{tpu_custom_call.1} parent=1 // pred_check
      _
    $region19: #{tpu_custom_call.1} parent=1 // pred_check_branch
      %51 = sbr.rel (0) target = $region21
    $region20: #{tpu_custom_call.1} parent=1 // pred_region
      %53 = dma.done [#allocation8], 128
    $region21: #{tpu_custom_call.1} parent=1 // pred_fallthru
      _
    // Predicated region
    $region22: #{tpu_custom_call.1} parent=1 // pred_check
      _
    $region23: #{tpu_custom_call.1} parent=1 // pred_check_branch
      %55 = sbr.rel (0) target = $region25
    $region24: #{tpu_custom_call.1} parent=1 // pred_region
      %57 = dma.done [#allocation8], 256
    $region25: #{tpu_custom_call.1} parent=1 // pred_fallthru
      _
    %p58 = scmp.eq.s32.totalorder 0, 0
    // Predicated region
    $region26: #{tpu_custom_call.1} parent=1 // pred_check
      %p59 = pneg %p58
    $region27: #{tpu_custom_call.1} parent=1 // pred_check_branch
      %61 = sbr.rel (%p59) target = $region29
    $region28: #{tpu_custom_call.1} parent=1 // pred_region
      %vm62 = vcmask 130048
      %63 = vst.msk [vmem:[#allocation2] sm:$0xff] %vm62, 0.0
      %vm64 = vcmask 7168
      %65 = vst.msk [vmem:[#allocation3] sm:$0xff] %vm64, 0.0
    $region29: #{tpu_custom_call.1} parent=1 // pred_fallthru
      _
    %v66 = vld [vmem:[#allocation7] sm:$0xff]
    %v67 = vld [vmem:[#allocation3] sm:$0xff]
    %v68 = vmul.f32 %v66, %v66
    %vm69 = vcmask 261120
    %v70 = vsel %vm69, %v68, 0.0
    %71 = vadd.xlane.f32.xlu0 %v70
    %v72 = vpop.xlane.xlu0 %71
    %v73 = vadd.f32 %v67, %v72
    %vm74 = vcmask 7168
    %75 = vst.msk [vmem:[#allocation3] sm:$0xff] %vm74, %v73
    %v76 = vld [vmem:[#allocation2] sm:$0xff]
    %v77 = vld [vmem:[#allocation9] sm:$0xff]
    %v78 = vld [vmem:[#allocation9 + $0x8] sm:$0xff]
    %v80 = vsel %vm69, %v66, 0
    %v83 = vsel %vm69, %v77, 0
    %v86 = vsel %vm69, %v78, 0
    %88 = vmatpush.xpose.msra.mxu0 0.0
    %89 = vmatpush.xpose.msra.mxu0 0.0
    %90 = vmatpush.xpose.msra.mxu0 0.0
    %91 = vmatpush.xpose.msra.mxu0 0.0
    %92 = vmatpush.xpose.msra.mxu0 0.0
    %93 = vmatpush.xpose.msra.mxu0 0.0
    %94 = vmatpush.xpose.msra.mxu0 0.0
    %95 = vmatpush.xpose.msra.mxu0 0.0
    %96 = vmatpush.xpose.msra.mxu0 0.0
    %97 = vmatpush.xpose.msra.mxu0 0.0
    %98 = vmatpush.xpose.msra.mxu0 0.0
    %99 = vmatpush.xpose.msra.mxu0 0.0
    %100 = vmatpush.xpose.msra.mxu0 0.0
    %101 = vmatpush.xpose.msra.mxu0 0.0
    %102 = vmatpush.xpose.msra.mxu0 %v86
    %103 = vmatpush.xpose.msra.mxu0 %v83
    %104 = vmatmul.f32.gmra.mxu0 %v80
    %v105 = vpop.f32.mrf.mxu0
    %v106 = vadd.f32 0.0, %v105
    %107 = vdwg.mxu0
    %v108 = vadd.f32 %v76, %v106
    %vm109 = vcmask 130048
    %110 = vst.msk [vmem:[#allocation2] sm:$0xff] %vm109, %v108
    // Predicated region
    $region30: #{tpu_custom_call.1} parent=1 // pred_check
      %p111 = pneg %p58
    $region31: #{tpu_custom_call.1} parent=1 // pred_check_branch
      %113 = sbr.rel (%p111) target = $region33
    $region32: #{tpu_custom_call.1} parent=1 // pred_region
      %v114 = vld [vmem:[#allocation3] sm:$0xff]
      %v115 = vmax.f32 %v114, 1e-24
      %v116 = vrsqrt.pop %v115
      %v117 = vmul.f32 %v116, %v115
      %v118 = vmul.f32 %v117, %v116
      %v119 = vmul.f32 0.5, %v118
      %v120 = vsub.f32 1.5, %v119
      %v121 = vmul.f32 %v116, %v120
      %vm122 = vweird.f32 %v115
      %vm123 = vweird.f32 %v116
      %vm124 = vmor %vm122, %vm123
      %v125 = vsel %vm124, %v116, %v121
      %v126 = vld [vmem:[#allocation2] sm:$0xff]
      %128 = vset.pattern.permute.xlu0 0
      %129 = vperm.xlu0 %128, %v125
      %v130 = vpop.permute.xlu0 %129
      %v132 = vmul.f32 %v126, %v130
      %v133 = vld [vmem:[#allocation4] sm:$0x1]
      %v135 = vperm.slane %v133, 0
      %v137 = vmul.f32 %v132, %v135
      %138 = vst.msk [vmem:[#allocation10] sm:$0xff] %vm109, %v137
    $region33: #{tpu_custom_call.1} parent=1 // pred_fallthru
      _
    // Predicated region
    $region34: #{tpu_custom_call.1} parent=1 // pred_check
      _
    $region35: #{tpu_custom_call.1} parent=1 // pred_check_branch
      %140 = sbr.rel (0) target = $region37
    $region36: #{tpu_custom_call.1} parent=1 // pred_region
      %142 = vsyncadd [#allocation6], 0
      %s144 = sshll.u32 [#allocation10], 4
      %s145 = int_to_ptr.vmem [resolvable:$true] %s144
      %s146 = sshll.u32 %s3, 4
      %s147 = int_to_ptr.hbm [resolvable:$true] %s146
      %149 = dma.vmem_to_hbm [thread:$0]  %s145, 128, %s147, [#allocation6]
    $region37: #{tpu_custom_call.1} parent=1 // pred_fallthru
      _
    // Predicated region
    $region38: #{tpu_custom_call.1} parent=1 // pred_check
      _
    $region39: #{tpu_custom_call.1} parent=1 // pred_check_branch
      %151 = sbr.rel (0) target = $region41
    $region40: #{tpu_custom_call.1} parent=1 // pred_region
      %153 = dma.done [#allocation6], 128
    $region41: #{tpu_custom_call.1} parent=1 // pred_fallthru
      _
    %154 = vsyncpa [#allocation5], 1
    %155 = vsyncpa [#allocation8], 1
    %156 = vsyncpa [#allocation6], 1

</llo_original>
